<compile_context>
chip_gen: v5e
topology: v5e:2x2
jax: 0.10.0
libtpu: 0.0.40
codegen_flags: <defaults>
</compile_context>

<pallas_src>
import functools

import jax
import jax.numpy as jnp
from jax.experimental import pallas as pl
from jax.experimental.pallas import tpu as pltpu

_LANE = 128
_SUBLANE = 8
_MIN_SPLIT_ROWS = 256  # force >=2 grid steps (v7x dual-TC) only above this many rows


def _round_up(x: int, m: int) -> int:
    return (x + m - 1) // m * m


def _detect_vmem_cap_bytes() -> int:
    """Per-generation VMEM budget with ~25% headroom for compiler scratch."""
    try:
        phys = int(pltpu.get_tpu_info().vmem_capacity_bytes)
        return max(16 * 1024 * 1024, (phys * 3) // 4)
    except Exception:
        return 48 * 1024 * 1024  # safe everywhere: v5e/v6e (128 MiB), v7x (64 MiB)


_VMEM_CAP_BYTES = _detect_vmem_cap_bytes()


def _mlp_kernel(x_ref, w1_ref, b1_ref, w2_ref, b2_ref, w3_ref, b3_ref, o_ref):
    # Layer 1: Linear(in_dim -> h_pad) + ReLU   (MXU matmul, f32 accumulate).
    h1 = jnp.dot(x_ref[...], w1_ref[...], preferred_element_type=jnp.float32)
    h1 = jnp.maximum(h1 + b1_ref[...], 0.0)            # biases pre-cast to f32

    # Layer 2: Linear(h_pad -> h_pad) + ReLU.
    h2 = jnp.dot(h1.astype(w2_ref.dtype), w2_ref[...],
                 preferred_element_type=jnp.float32)
    h2 = jnp.maximum(h2 + b2_ref[...], 0.0)

    # Layer 3: Linear(h_pad -> out_dim). Output block is (tb, out_dim), so the
    # HBM writeback is only out_dim columns wide (no 128-wide padding).
    out = jnp.dot(h2.astype(w3_ref.dtype), w3_ref[...],
                  preferred_element_type=jnp.float32)
    o_ref[...] = (out + b3_ref[...]).astype(o_ref.dtype)


@functools.partial(jax.jit, static_argnames=("batch_tile",))
def il_network_forward(x, w1, b1, w2, b2, w3, b3, *, batch_tile: int = 4096):
    """Fused IL_Network forward: batch-tiled grid, VMEM-resident padded weights."""
    batch, in_dim = x.shape
    hidden = w1.shape[1]
    out_dim = w3.shape[1]
    dtype = x.dtype
    itemsize = jnp.dtype(dtype).itemsize

    # --- pad hidden dim to full lanes (exact: zero rows/cols contribute 0) ----
    h_pad = _round_up(max(hidden, _LANE), _LANE)
    w1p = jnp.zeros((in_dim, h_pad), w1.dtype).at[:, :hidden].set(w1)
    w2p = jnp.zeros((h_pad, h_pad), w2.dtype).at[:hidden, :hidden].set(w2)
    w3p = jnp.zeros((h_pad, out_dim), w3.dtype).at[:hidden, :].set(w3)
    # Biases: VMEM-resident, pre-cast to f32 (no per-step casts in the kernel).
    b1p = jnp.zeros((1, h_pad), jnp.float32).at[:, :hidden].set(b1.astype(jnp.float32))
    b2p = jnp.zeros((1, h_pad), jnp.float32).at[:, :hidden].set(b2.astype(jnp.float32))
    b3p = b3.astype(jnp.float32)

    weight_bytes = sum(int(a.size) * jnp.dtype(a.dtype).itemsize
                       for a in (w1p, b1p, w2p, b2p, w3p, b3p))

    # --- batch tile: large (amortize ~0.35 us/step), capped by real VMEM use,
    #     and split into >=2 grid steps for big batches (v7x dual-TC) ----------
    rb = _round_up(batch, _SUBLANE)
    row_bytes = (in_dim + out_dim) * itemsize          # streamed bytes per row
    stream_budget = max(0, _VMEM_CAP_BYTES // 2 - weight_bytes)
    tb_vmem = max(_SUBLANE,
                  (stream_budget // max(1, 2 * row_bytes)) // _SUBLANE * _SUBLANE)

    tb = min(int(batch_tile), rb, int(tb_vmem))
    if rb >= _MIN_SPLIT_ROWS:
        tb = min(tb, _round_up(pl.cdiv(rb, 2), _SUBLANE))
    tb = max(_SUBLANE, _round_up(tb, _SUBLANE))

    padded_batch = _round_up(batch, tb)
    if padded_batch != batch:
        x = jnp.pad(x, ((0, padded_batch - batch), (0, 0)))
    grid = (padded_batch // tb,)

    # Advisory cost estimate for XLA's scheduler (unpadded output traffic).
    flops = 2 * padded_batch * (in_dim * h_pad + h_pad * h_pad + h_pad * out_dim)
    bytes_accessed = (padded_batch * in_dim * itemsize
                      + weight_bytes
                      + padded_batch * out_dim * itemsize)
    cost = pl.CostEstimate(flops=flops, transcendentals=0,
                           bytes_accessed=bytes_accessed)

    # Explicit VMEM budget: resident weights + double-buffered x/out tiles, 2x
    # margin, capped below the per-generation physical VMEM with headroom.
    stream_bytes = 2 * tb * row_bytes
    vmem_limit = int(min(_VMEM_CAP_BYTES,
                         max(16 * 1024 * 1024, 2 * (weight_bytes + stream_bytes))))

    def _resident(a):
        # Whole array, same block every grid step -> DMA'd once, stays in VMEM.
        return pl.BlockSpec(a.shape, lambda i: (0, 0))

    in_specs = [
        pl.BlockSpec((tb, in_dim), lambda i: (i, 0)),   # streamed x tile
        _resident(w1p), _resident(b1p),
        _resident(w2p), _resident(b2p),
        _resident(w3p), _resident(b3p),
    ]
    out_spec = pl.BlockSpec((tb, out_dim), lambda i: (i, 0))

    out = pl.pallas_call(
        _mlp_kernel,
        out_shape=jax.ShapeDtypeStruct((padded_batch, out_dim), dtype),
        grid=grid,
        in_specs=in_specs,
        out_specs=out_spec,
        compiler_params=pltpu.CompilerParams(
            dimension_semantics=("parallel",),
            vmem_limit_bytes=vmem_limit,
        ),
        cost_estimate=cost,
    )(x, w1p, b1p, w2p, b2p, w3p, b3p)

    # Slice away the batch padding (output columns are already exactly out_dim).
    return out[:batch]


def init_params(key, in_dim, out_dim, hidden_size, dtype=jnp.float32):
    """Deterministic PyTorch-nn.Linear-style init (uniform(-1/sqrt(fan_in), ..))."""
    ks = jax.random.split(key, 6)

    def linear(kw, kb, fan_in, fan_out):
        bound = 1.0 / jnp.sqrt(jnp.asarray(fan_in, dtype))
        w = jax.random.uniform(kw, (fan_in, fan_out), dtype, -bound, bound)
        b = jax.random.uniform(kb, (1, fan_out), dtype, -bound, bound)
        return w, b

    w1, b1 = linear(ks[0], ks[1], in_dim, hidden_size)
    w2, b2 = linear(ks[2], ks[3], hidden_size, hidden_size)
    w3, b3 = linear(ks[4], ks[5], hidden_size, out_dim)
    return w1, b1, w2, b2, w3, b3


def reference_forward(x, w1, b1, w2, b2, w3, b3):
    h1 = jnp.maximum(x @ w1 + b1, 0.0)
    h2 = jnp.maximum(h1 @ w2 + b2, 0.0)
    return h2 @ w3 + b3


if __name__ == "__main__":
    # Small shapes consistent with the module: Linear expects (batch, in_dim).
    batch, in_dim, hidden_size, out_dim = 8, 16, 32, 4

    key = jax.random.PRNGKey(0)
    k_x, k_p = jax.random.split(key)
    x = jax.random.normal(k_x, (batch, in_dim), jnp.float32)
    params = init_params(k_p, in_dim, out_dim, hidden_size)

    out = jax.block_until_ready(il_network_forward(x, *params))
    ref = reference_forward(x, *params)
    assert out.shape == (batch, out_dim)
    assert jnp.allclose(out, ref, atol=1e-5, rtol=1e-5)

    # Also exercise the tiled/padded path (>=2 grid steps) with a larger,
    # non-multiple-of-8 batch.
    xb = jax.random.normal(jax.random.PRNGKey(1), (300, in_dim), jnp.float32)
    outb = jax.block_until_ready(il_network_forward(xb, *params))
    refb = reference_forward(xb, *params)
    assert outb.shape == (300, out_dim)
    assert jnp.allclose(outb, refb, atol=1e-5, rtol=1e-5)

    print("KERNEL_OK")
</pallas_src>

<mosaic_0001>
module attributes {stable_mosaic.version = 11 : i64} {
  func.func @_mlp_kernel(%arg0: i32, %arg1: memref<8x16xf32, #tpu.memory_space<vmem>>, %arg2: memref<16x128xf32, #tpu.memory_space<vmem>>, %arg3: memref<1x128xf32, #tpu.memory_space<vmem>>, %arg4: memref<128x128xf32, #tpu.memory_space<vmem>>, %arg5: memref<1x128xf32, #tpu.memory_space<vmem>>, %arg6: memref<128x4xf32, #tpu.memory_space<vmem>>, %arg7: memref<1x4xf32, #tpu.memory_space<vmem>>, %arg8: memref<8x4xf32, #tpu.memory_space<vmem>>) attributes {dimension_semantics = [#tpu.dimension_semantics<parallel>], iteration_bounds = array<i64: 1>, scalar_prefetch = 0 : i64, scratch_operands = 0 : i64, tpu.core_type = #tpu.core_type<tc>, window_params = [{transform_indices = @transform_0, window_bounds = array<i64: 8, 16>}, {pipeline_mode = #tpu.pipeline_mode<synchronous>, transform_indices = @transform_1, window_bounds = array<i64: 16, 128>}, {pipeline_mode = #tpu.pipeline_mode<synchronous>, transform_indices = @transform_2, window_bounds = array<i64: 1, 128>}, {pipeline_mode = #tpu.pipeline_mode<synchronous>, transform_indices = @transform_3, window_bounds = array<i64: 128, 128>}, {pipeline_mode = #tpu.pipeline_mode<synchronous>, transform_indices = @transform_4, window_bounds = array<i64: 1, 128>}, {pipeline_mode = #tpu.pipeline_mode<synchronous>, transform_indices = @transform_5, window_bounds = array<i64: 128, 4>}, {pipeline_mode = #tpu.pipeline_mode<synchronous>, transform_indices = @transform_6, window_bounds = array<i64: 1, 4>}, {transform_indices = @transform_7, window_bounds = array<i64: 8, 4>}]} {
    %c0 = arith.constant 0 : index
    %c0_0 = arith.constant 0 : index
    %0 = vector.load %arg1[%c0, %c0_0] : memref<8x16xf32, #tpu.memory_space<vmem>>, vector<8x16xf32>
    %c0_1 = arith.constant 0 : index
    %c0_2 = arith.constant 0 : index
    %1 = vector.load %arg2[%c0_1, %c0_2] : memref<16x128xf32, #tpu.memory_space<vmem>>, vector<16x128xf32>
    %cst = arith.constant dense<0.000000e+00> : vector<8x128xf32>
    %2 = tpu.matmul %0, %1, %cst {dimension_numbers = #tpu.dot_dimension_numbers<[1], [0], [0], [1], [0, 0, 1, 1], [], []>} : vector<8x16xf32>, vector<16x128xf32>, vector<8x128xf32> -> vector<8x128xf32>
    %c0_3 = arith.constant 0 : index
    %c0_4 = arith.constant 0 : index
    %3 = vector.load %arg3[%c0_3, %c0_4] : memref<1x128xf32, #tpu.memory_space<vmem>>, vector<1x128xf32>
    %4 = vector.broadcast %3 : vector<1x128xf32> to vector<8x128xf32>
    %5 = arith.addf %2, %4 : vector<8x128xf32>
    %cst_5 = arith.constant 0.000000e+00 : f32
    %6 = vector.broadcast %cst_5 : f32 to vector<8x128xf32>
    %7 = arith.maximumf %5, %6 : vector<8x128xf32>
    %c0_6 = arith.constant 0 : index
    %c0_7 = arith.constant 0 : index
    %8 = vector.load %arg4[%c0_6, %c0_7] : memref<128x128xf32, #tpu.memory_space<vmem>>, vector<128x128xf32>
    %cst_8 = arith.constant dense<0.000000e+00> : vector<8x128xf32>
    %9 = tpu.matmul %7, %8, %cst_8 {dimension_numbers = #tpu.dot_dimension_numbers<[1], [0], [0], [1], [0, 0, 1, 1], [], []>} : vector<8x128xf32>, vector<128x128xf32>, vector<8x128xf32> -> vector<8x128xf32>
    %c0_9 = arith.constant 0 : index
    %c0_10 = arith.constant 0 : index
    %10 = vector.load %arg5[%c0_9, %c0_10] : memref<1x128xf32, #tpu.memory_space<vmem>>, vector<1x128xf32>
    %11 = vector.broadcast %10 : vector<1x128xf32> to vector<8x128xf32>
    %12 = arith.addf %9, %11 : vector<8x128xf32>
    %cst_11 = arith.constant 0.000000e+00 : f32
    %13 = vector.broadcast %cst_11 : f32 to vector<8x128xf32>
    %14 = arith.maximumf %12, %13 : vector<8x128xf32>
    %c0_12 = arith.constant 0 : index
    %c0_13 = arith.constant 0 : index
    %15 = vector.load %arg6[%c0_12, %c0_13] : memref<128x4xf32, #tpu.memory_space<vmem>>, vector<128x4xf32>
    %cst_14 = arith.constant dense<0.000000e+00> : vector<8x4xf32>
    %16 = tpu.matmul %14, %15, %cst_14 {dimension_numbers = #tpu.dot_dimension_numbers<[1], [0], [0], [1], [0, 0, 1, 1], [], []>} : vector<8x128xf32>, vector<128x4xf32>, vector<8x4xf32> -> vector<8x4xf32>
    %c0_15 = arith.constant 0 : index
    %c0_16 = arith.constant 0 : index
    %17 = vector.load %arg7[%c0_15, %c0_16] : memref<1x4xf32, #tpu.memory_space<vmem>>, vector<1x4xf32>
    %18 = vector.broadcast %17 : vector<1x4xf32> to vector<8x4xf32>
    %19 = arith.addf %16, %18 : vector<8x4xf32>
    %c0_17 = arith.constant 0 : index
    %c0_18 = arith.constant 0 : index
    %20 = vector.load %arg8[%c0_17, %c0_18] : memref<8x4xf32, #tpu.memory_space<vmem>>, vector<8x4xf32>
    tpu.vector_store %arg8[%c0_17, %c0_18], %19 {strides = array<i32>} : memref<8x4xf32, #tpu.memory_space<vmem>>, vector<8x4xf32>,
    return
  }
  func.func @transform_0(%arg0: i32) -> (i32, i32) {
    %c0_i32 = arith.constant 0 : i32
    %c0_i32_0 = arith.constant 0 : i32
    return %arg0, %c0_i32 : i32, i32
  }
  func.func @transform_1(%arg0: i32) -> (i32, i32) {
    %c0_i32 = arith.constant 0 : i32
    %c0_i32_0 = arith.constant 0 : i32
    %c0_i32_1 = arith.constant 0 : i32
    return %c0_i32, %c0_i32_0 : i32, i32
  }
  func.func @transform_2(%arg0: i32) -> (i32, i32) {
    %c0_i32 = arith.constant 0 : i32
    %c0_i32_0 = arith.constant 0 : i32
    %c0_i32_1 = arith.constant 0 : i32
    return %c0_i32, %c0_i32_0 : i32, i32
  }
  func.func @transform_3(%arg0: i32) -> (i32, i32) {
    %c0_i32 = arith.constant 0 : i32
    %c0_i32_0 = arith.constant 0 : i32
    %c0_i32_1 = arith.constant 0 : i32
    return %c0_i32, %c0_i32_0 : i32, i32
  }
  func.func @transform_4(%arg0: i32) -> (i32, i32) {
    %c0_i32 = arith.constant 0 : i32
    %c0_i32_0 = arith.constant 0 : i32
    %c0_i32_1 = arith.constant 0 : i32
    return %c0_i32, %c0_i32_0 : i32, i32
  }
  func.func @transform_5(%arg0: i32) -> (i32, i32) {
    %c0_i32 = arith.constant 0 : i32
    %c0_i32_0 = arith.constant 0 : i32
    %c0_i32_1 = arith.constant 0 : i32
    return %c0_i32, %c0_i32_0 : i32, i32
  }
  func.func @transform_6(%arg0: i32) -> (i32, i32) {
    %c0_i32 = arith.constant 0 : i32
    %c0_i32_0 = arith.constant 0 : i32
    %c0_i32_1 = arith.constant 0 : i32
    return %c0_i32, %c0_i32_0 : i32, i32
  }
  func.func @transform_7(%arg0: i32) -> (i32, i32) {
    %c0_i32 = arith.constant 0 : i32
    %c0_i32_0 = arith.constant 0 : i32
    return %arg0, %c0_i32 : i32, i32
  }
}

</mosaic_0001>

<llo_original>
// kernel: il_network_forward.1
$region0: #{il_network_forward.1}
  #allocation0 [shape = 'u32[]', space=smem, size = 0x4, offset = 0x4, fixed_abs, tag = 'smem constant byte address 0x4 - core index']
  #allocation1 [shape = 'u32[72,128]{1,0:T(1,128)}', space=vmem, size = 0x9000, scoped, tag = 'internal scratch']
  %s0 = inlined_call_operand.vmem [shape: f32[8,16], index: 0, kind: input, shape index: {}]
  %s1 = inlined_call_operand.vmem [shape: f32[16,128], index: 1, kind: input, shape index: {}]
  %s2 = inlined_call_operand.vmem [shape: f32[1,128], index: 2, kind: input, shape index: {}]
  %s3 = inlined_call_operand.vmem [shape: f32[128,128], index: 3, kind: input, shape index: {}]
  %s4 = inlined_call_operand.vmem [shape: f32[1,128], index: 4, kind: input, shape index: {}]
  %s5 = inlined_call_operand.vmem [shape: f32[128,4], index: 5, kind: input, shape index: {}]
  %s6 = inlined_call_operand.vmem [shape: f32[1,4], index: 6, kind: input, shape index: {}]
  %s7 = inlined_call_operand.vmem [shape: f32[8,4], index: 7, kind: output, shape index: {}]
  %s8 = sld [smem:[#allocation0]]
  $region38: #{il_network_forward.1} parent=0
    _
  %s10 = ssub.s32 1, %s8
  %s11 = scalar_select 0, %s10, %s8
  // Predicated region
  $region2: #{il_network_forward.1} parent=0 // pred_check
    _
  $region3: #{il_network_forward.1} parent=0 // pred_check_branch
    %13 = sbr.rel (0) target = $region5
  $region4: #{il_network_forward.1} parent=0 // pred_region
    _
  $region5: #{il_network_forward.1} parent=0 // pred_fallthru
    _
  // Predicated region
  $region6: #{il_network_forward.1} parent=0 // pred_check
    _
  $region7: #{il_network_forward.1} parent=0 // pred_check_branch
    %15 = sbr.rel (0) target = $region9
  $region8: #{il_network_forward.1} parent=0 // pred_region
    _
  $region9: #{il_network_forward.1} parent=0 // pred_fallthru
    _
  // Predicated region
  $region10: #{il_network_forward.1} parent=0 // pred_check
    _
  $region11: #{il_network_forward.1} parent=0 // pred_check_branch
    %17 = sbr.rel (0) target = $region13
  $region12: #{il_network_forward.1} parent=0 // pred_region
    _
  $region13: #{il_network_forward.1} parent=0 // pred_fallthru
    _
  // Predicated region
  $region14: #{il_network_forward.1} parent=0 // pred_check
    _
  $region15: #{il_network_forward.1} parent=0 // pred_check_branch
    %19 = sbr.rel (0) target = $region17
  $region16: #{il_network_forward.1} parent=0 // pred_region
    _
  $region17: #{il_network_forward.1} parent=0 // pred_fallthru
    _
  // Predicated region
  $region18: #{il_network_forward.1} parent=0 // pred_check
    _
  $region19: #{il_network_forward.1} parent=0 // pred_check_branch
    %21 = sbr.rel (0) target = $region21
  $region20: #{il_network_forward.1} parent=0 // pred_region
    _
  $region21: #{il_network_forward.1} parent=0 // pred_fallthru
    _
  // Predicated region
  $region22: #{il_network_forward.1} parent=0 // pred_check
    _
  $region23: #{il_network_forward.1} parent=0 // pred_check_branch
    %23 = sbr.rel (0) target = $region25
  $region24: #{il_network_forward.1} parent=0 // pred_region
    _
  $region25: #{il_network_forward.1} parent=0 // pred_fallthru
    _
  // Predicated region
  $region26: #{il_network_forward.1} parent=0 // pred_check
    _
  $region27: #{il_network_forward.1} parent=0 // pred_check_branch
    %25 = sbr.rel (0) target = $region29
  $region28: #{il_network_forward.1} parent=0 // pred_region
    _
  $region29: #{il_network_forward.1} parent=0 // pred_fallthru
    _
  %v26 = vld [vmem:[%s0] sm:$0xff]
  %v27 = vld [vmem:[%s1] sm:$0xff]
  %v28 = vld [vmem:[%s1 + $0x8] sm:$0xff]
  %v29 = vld [vmem:[%s2] sm:$0x1]
  %v31 = vperm.slane %v29, 0
  %vm33 = vcmask 130048
  %v35 = vsel %vm33, %v26, 0
  %37 = vmatpush.msra.mxu0 0.0
  %38 = vmatpush.msra.mxu0 0.0
  %39 = vmatpush.msra.mxu0 0.0
  %40 = vmatpush.msra.mxu0 0.0
  %41 = vmatpush.msra.mxu0 0.0
  %42 = vmatpush.msra.mxu0 0.0
  %43 = vmatpush.msra.mxu0 0.0
  %44 = vmatpush.msra.mxu0 0.0
  %45 = vmatpush.msra.mxu0 0.0
  %46 = vmatpush.msra.mxu0 0.0
  %47 = vmatpush.msra.mxu0 0.0
  %48 = vmatpush.msra.mxu0 0.0
  %49 = vmatpush.msra.mxu0 0.0
  %50 = vmatpush.msra.mxu0 0.0
  %51 = vmatpush.msra.mxu0 %v28
  %52 = vmatpush.msra.mxu0 %v27
  %53 = vmatmul.f32.gmra.mxu0 %v35
  %v54 = vpop.f32.mrf.mxu0
  %v55 = vadd.f32 %v31, %v54
  %56 = vdwg.mxu0
  %v57 = vmax.f32 %v55, 0.0
  %v58 = vld [vmem:[%s3] sm:$0xff]
  %v59 = vld [vmem:[%s3 + $0x8] sm:$0xff]
  %v60 = vld [vmem:[%s3 + $0x10] sm:$0xff]
  %v61 = vld [vmem:[%s3 + $0x18] sm:$0xff]
  %v62 = vld [vmem:[%s3 + $0x20] sm:$0xff]
  %v63 = vld [vmem:[%s3 + $0x28] sm:$0xff]
  %v64 = vld [vmem:[%s3 + $0x30] sm:$0xff]
  %v65 = vld [vmem:[%s3 + $0x38] sm:$0xff]
  %v66 = vld [vmem:[%s3 + $0x40] sm:$0xff]
  %v67 = vld [vmem:[%s3 + $0x48] sm:$0xff]
  %v68 = vld [vmem:[%s3 + $0x50] sm:$0xff]
  %v69 = vld [vmem:[%s3 + $0x58] sm:$0xff]
  %v70 = vld [vmem:[%s3 + $0x60] sm:$0xff]
  %v71 = vld [vmem:[%s3 + $0x68] sm:$0xff]
  %v72 = vld [vmem:[%s3 + $0x70] sm:$0xff]
  %v73 = vld [vmem:[%s3 + $0x78] sm:$0xff]
  %v74 = vld [vmem:[%s4] sm:$0x1]
  %v76 = vperm.slane %v74, 0
  %78 = vmatpush.msra.mxu0 %v73
  %79 = vmatpush.msra.mxu0 %v72
  %80 = vmatpush.msra.mxu0 %v71
  %81 = vmatpush.msra.mxu0 %v70
  %82 = vmatpush.msra.mxu0 %v69
  %83 = vmatpush.msra.mxu0 %v68
  %84 = vmatpush.msra.mxu0 %v67
  %85 = vmatpush.msra.mxu0 %v66
  %86 = vmatpush.msra.mxu0 %v65
  %87 = vmatpush.msra.mxu0 %v64
  %88 = vmatpush.msra.mxu0 %v63
  %89 = vmatpush.msra.mxu0 %v62
  %90 = vmatpush.msra.mxu0 %v61
  %91 = vmatpush.msra.mxu0 %v60
  %92 = vmatpush.msra.mxu0 %v59
  %93 = vmatpush.msra.mxu0 %v58
  %94 = vmatmul.f32.gmra.mxu0 %v57
  %v95 = vpop.f32.mrf.mxu0
  %v96 = vadd.f32 %v76, %v95
  %97 = vdwg.mxu0
  %v98 = vmax.f32 %v96, 0.0
  %v99 = vld [vmem:[%s5] sm:$0xff]
  %v100 = vld [vmem:[%s5 + $0x8] sm:$0xff]
  %v101 = vld [vmem:[%s5 + $0x10] sm:$0xff]
  %v102 = vld [vmem:[%s5 + $0x18] sm:$0xff]
  %v103 = vld [vmem:[%s5 + $0x20] sm:$0xff]
  %v104 = vld [vmem:[%s5 + $0x28] sm:$0xff]
  %v105 = vld [vmem:[%s5 + $0x30] sm:$0xff]
  %v106 = vld [vmem:[%s5 + $0x38] sm:$0xff]
  %v107 = vld [vmem:[%s5 + $0x40] sm:$0xff]
  %v108 = vld [vmem:[%s5 + $0x48] sm:$0xff]
  %v109 = vld [vmem:[%s5 + $0x50] sm:$0xff]
  %v110 = vld [vmem:[%s5 + $0x58] sm:$0xff]
  %v111 = vld [vmem:[%s5 + $0x60] sm:$0xff]
  %v112 = vld [vmem:[%s5 + $0x68] sm:$0xff]
  %v113 = vld [vmem:[%s5 + $0x70] sm:$0xff]
  %v114 = vld [vmem:[%s5 + $0x78] sm:$0xff]
  %v115 = vld [vmem:[%s6] sm:$0x1]
  %v117 = vperm.slane %v115, 0
  %119 = vmatpush.msra.mxu0 %v114
  %120 = vmatpush.msra.mxu0 %v113
  %121 = vmatpush.msra.mxu0 %v112
  %122 = vmatpush.msra.mxu0 %v111
  %123 = vmatpush.msra.mxu0 %v110
  %124 = vmatpush.msra.mxu0 %v109
  %125 = vmatpush.msra.mxu0 %v108
  %126 = vmatpush.msra.mxu0 %v107
  %127 = vmatpush.msra.mxu0 %v106
  %128 = vmatpush.msra.mxu0 %v105
  %129 = vmatpush.msra.mxu0 %v104
  %130 = vmatpush.msra.mxu0 %v103
  %131 = vmatpush.msra.mxu0 %v102
  %132 = vmatpush.msra.mxu0 %v101
  %133 = vmatpush.msra.mxu0 %v100
  %134 = vmatpush.msra.mxu0 %v99
  %135 = vmatmul.f32.gmra.mxu0 %v98
  %v136 = vpop.f32.mrf.mxu0
  %v137 = vadd.f32 %v117, %v136
  %138 = vdwg.mxu0
  %vm139 = vcmask 31744
  %140 = vst.msk [vmem:[%s7] sm:$0xff] %vm139, %v137
  // Predicated region
  $region30: #{il_network_forward.1} parent=0 // pred_check
    _
  $region31: #{il_network_forward.1} parent=0 // pred_check_branch
    %142 = sbr.rel (0) target = $region33
  $region32: #{il_network_forward.1} parent=0 // pred_region
    _
  $region33: #{il_network_forward.1} parent=0 // pred_fallthru
    _
  // Predicated region
  $region34: #{il_network_forward.1} parent=0 // pred_check
    _
  $region35: #{il_network_forward.1} parent=0 // pred_check_branch
    %144 = sbr.rel (0) target = $region37
  $region36: #{il_network_forward.1} parent=0 // pred_region
    _
  $region37: #{il_network_forward.1} parent=0 // pred_fallthru
    _

</llo_original>
